<compile_context>
chip_gen: v6e
topology: v6e:2x2x1
jax: 0.10.0
libtpu: 0.0.40
codegen_flags: <defaults>
</compile_context>

<pallas_src>
import jax
import jax.numpy as jnp
from jax.experimental import pallas as pl
from jax.experimental.pallas import tpu as pltpu


def _vocab_passthrough_kernel(x_ref, o_ref):
    # Identity "forward": values = forward(x). No defined math in the ABC.
    o_ref[...] = x_ref[...]


def _round_down(x: int, m: int) -> int:
    return (x // m) * m


def base_vocabulary_forward(x: jax.Array, *, max_block_bytes: int = 4 * 1024 * 1024) -> jax.Array:
    """Pallas stand-in for BaseVocabulary.__call__ -> forward (abstract).

    x: [B, V] scores (any dtype; purely memory-bound copy, so bf16 inputs halve
    HBM traffic "for free"). Returns x unchanged, computed through a tiled,
    input-output-aliased Pallas TPU kernel.
    """
    B, V = x.shape
    itemsize = jnp.dtype(x.dtype).itemsize
    # Minimum sublane multiple for the dtype: 8 rows for f32, 16 for bf16, 32 for int8.
    sub_mult = max(8, 32 // itemsize)

    # --- vocab tiling: prefer the full, lane-dense V dim in a single slab ---
    if sub_mult * V * itemsize <= max_block_bytes:
        tile_v = V  # full array dim: no %128 requirement
    else:
        cand = _round_down(max_block_bytes // (sub_mult * itemsize), 128)
        cap = _round_down(V, 128) if V >= 128 else V
        tile_v = max(128, min(cand, cap))  # multiple of 128; ragged edge handled by cdiv grid

    # --- batch tiling: as many rows as fit the block budget ---
    tile_b = max_block_bytes // (tile_v * itemsize)
    if tile_b >= B:
        tile_b = B  # full array dim: no divisibility requirement
    else:
        tile_b = max(sub_mult, _round_down(tile_b, sub_mult))

    block_bytes = tile_b * tile_v * itemsize
    # Budget: input + output blocks, each double-buffered, plus headroom.
    # Raised above v5e's 16 MiB default scoped limit, capped under v7x's 64 MiB
    # physical VMEM per TensorCore.
    vmem_limit = int(min(56 * 1024 * 1024,
                         max(32 * 1024 * 1024, 4 * block_bytes + 4 * 1024 * 1024)))

    if tile_v == V:
        # 1-D grid over batch: big contiguous row slabs, fewest grid steps.
        grid = (pl.cdiv(B, tile_b),)
        in_spec = pl.BlockSpec((tile_b, V), lambda i: (i, 0))
        out_spec = pl.BlockSpec((tile_b, V), lambda i: (i, 0))
        dim_sem = ("parallel",)
    else:
        # Huge vocab: also tile V with a large multiple-of-128 lane-dense tile.
        grid = (pl.cdiv(B, tile_b), pl.cdiv(V, tile_v))
        in_spec = pl.BlockSpec((tile_b, tile_v), lambda i, j: (i, j))
        out_spec = pl.BlockSpec((tile_b, tile_v), lambda i, j: (i, j))
        dim_sem = ("parallel", "parallel")

    return pl.pallas_call(
        _vocab_passthrough_kernel,
        out_shape=jax.ShapeDtypeStruct((B, V), x.dtype),
        grid=grid,
        in_specs=[in_spec],
        out_specs=out_spec,
        # Identity op: let XLA reuse the input HBM buffer for the output
        # (effective when the caller donates x at the jit boundary).
        input_output_aliases={0: 0},
        compiler_params=pltpu.CompilerParams(
            dimension_semantics=dim_sem,   # "parallel" lets v7x shard across its 2 TCs
            vmem_limit_bytes=vmem_limit,
        ),
    )(x)


if __name__ == "__main__":
    key = jax.random.PRNGKey(0)

    # Small, tile-aligned synthetic input: batch=8 "queries", vocab=128 scores.
    x = jax.random.normal(key, (8, 128), dtype=jnp.float32)
    y = base_vocabulary_forward(x)
    jax.block_until_ready(y)
    assert y.shape == x.shape and y.dtype == x.dtype
    assert bool(jnp.array_equal(y, x))

    # Non-tile-aligned shape (the old hard assert is gone): B=10, V=300.
    key2 = jax.random.PRNGKey(1)
    x2 = jax.random.normal(key2, (10, 300), dtype=jnp.float32)
    y2 = base_vocabulary_forward(x2)
    jax.block_until_ready(y2)
    assert y2.shape == x2.shape and y2.dtype == x2.dtype
    assert bool(jnp.array_equal(y2, x2))

    print("KERNEL_OK")
</pallas_src>

<mosaic_0001>
module attributes {stable_mosaic.version = 11 : i64} {
  func.func @_vocab_passthrough_kernel(%arg0: i32, %arg1: memref<8x128xf32, #tpu.memory_space<vmem>>, %arg2: memref<8x128xf32, #tpu.memory_space<vmem>>) attributes {dimension_semantics = [#tpu.dimension_semantics<parallel>], iteration_bounds = array<i64: 1>, scalar_prefetch = 0 : i64, scratch_operands = 0 : i64, tpu.core_type = #tpu.core_type<tc>, window_params = [{transform_indices = @transform_0, window_bounds = array<i64: 8, 128>}, {transform_indices = @transform_1, window_bounds = array<i64: 8, 128>}]} {
    %c0 = arith.constant 0 : index
    %c0_0 = arith.constant 0 : index
    %0 = vector.load %arg1[%c0, %c0_0] : memref<8x128xf32, #tpu.memory_space<vmem>>, vector<8x128xf32>
    %c0_1 = arith.constant 0 : index
    %c0_2 = arith.constant 0 : index
    %1 = vector.load %arg2[%c0_1, %c0_2] : memref<8x128xf32, #tpu.memory_space<vmem>>, vector<8x128xf32>
    tpu.vector_store %arg2[%c0_1, %c0_2], %0 {strides = array<i32>} : memref<8x128xf32, #tpu.memory_space<vmem>>, vector<8x128xf32>,
    return
  }
  func.func @transform_0(%arg0: i32) -> (i32, i32) {
    %c0_i32 = arith.constant 0 : i32
    %c0_i32_0 = arith.constant 0 : i32
    return %arg0, %c0_i32 : i32, i32
  }
  func.func @transform_1(%arg0: i32) -> (i32, i32) {
    %c0_i32 = arith.constant 0 : i32
    %c0_i32_0 = arith.constant 0 : i32
    return %arg0, %c0_i32 : i32, i32
  }
}

</mosaic_0001>

<llo_original>
// kernel: tpu_custom_call.1
$region0: #{tpu_custom_call.1}
  #allocation0 [shape = 'u32[]', space=smem, size = 0x4, offset = 0x4, fixed_abs, tag = 'smem constant byte address 0x4 - core index']
  #allocation1 [shape = 'u32[144,128]{1,0:T(1,128)}', space=vmem, size = 0x12000, scoped, tag = 'internal scratch']
  %s0 = inlined_call_operand.hbm [shape: f32[8,128], index: 0, kind: input, shape index: {}, may-alias: {0,1}]
  %s1 = inlined_call_operand.hbm [shape: f32[8,128], index: 1, kind: output, shape index: {}, may-alias: {0,1}]
  %s2 = sld [smem:[#allocation0]]
  $region18: #{tpu_custom_call.1} parent=0
    _
  %s4 = ssub.s32 1, %s2
  %s5 = scalar_select 0, %s4, %s2
  $region1: #{tpu_custom_call.1} parent=0
    #allocation2 [shape = 'u8[4096]{0}', space=vmem, size = 0x1000, scoped, tag = 'input window, operand 0, single buffered']
    #allocation3 [shape = 's32[1]{0}', space=sflag, size = 0x4, scoped, tag = 'scoped memory for tpu_custom_call.1']
    #allocation4 [shape = 's32[1]{0}', space=sflag, size = 0x4, scoped, tag = 'scoped memory for tpu_custom_call.1']
    #allocation5 [shape = 'u8[4096]{0}', space=vmem, size = 0x1000, scoped, tag = 'output window, operand 0, single buffered']
    %6 = vsyncpa [#allocation3], 0
    %7 = vsyncpa [#allocation4], 0
    // Predicated region
    $region2: #{tpu_custom_call.1} parent=1 // pred_check
      _
    $region3: #{tpu_custom_call.1} parent=1 // pred_check_branch
      %9 = sbr.rel (0) target = $region5
    $region4: #{tpu_custom_call.1} parent=1 // pred_region
      %s11 = ssub.s32 128, 128
      %12 = vsyncadd [#allocation3], %s11
      %s14 = sshll.u32 [#allocation2], 4
      %s15 = int_to_ptr.vmem [resolvable:$true] %s14
      %17 = dma.hbm_to_vmem [thread:$0]  %s0, 128, %s15, [#allocation3]
    $region5: #{tpu_custom_call.1} parent=1 // pred_fallthru
      _
    // Predicated region
    $region6: #{tpu_custom_call.1} parent=1 // pred_check
      _
    $region7: #{tpu_custom_call.1} parent=1 // pred_check_branch
      %19 = sbr.rel (0) target = $region9
    $region8: #{tpu_custom_call.1} parent=1 // pred_region
      %20 = dma.done [#allocation3], 128
    $region9: #{tpu_custom_call.1} parent=1 // pred_fallthru
      _
    %v21 = vld [vmem:[#allocation2] sm:$0xff]
    %22 = vst [vmem:[#allocation5] sm:$0xff] %v21
    // Predicated region
    $region10: #{tpu_custom_call.1} parent=1 // pred_check
      _
    $region11: #{tpu_custom_call.1} parent=1 // pred_check_branch
      %24 = sbr.rel (0) target = $region13
    $region12: #{tpu_custom_call.1} parent=1 // pred_region
      %s26 = ssub.s32 128, 128
      %27 = vsyncadd [#allocation4], %s26
      %s29 = sshll.u32 [#allocation5], 4
      %s30 = int_to_ptr.vmem [resolvable:$true] %s29
      %32 = dma.vmem_to_hbm [thread:$0]  %s30, 128, %s1, [#allocation4]
    $region13: #{tpu_custom_call.1} parent=1 // pred_fallthru
      _
    // Predicated region
    $region14: #{tpu_custom_call.1} parent=1 // pred_check
      _
    $region15: #{tpu_custom_call.1} parent=1 // pred_check_branch
      %34 = sbr.rel (0) target = $region17
    $region16: #{tpu_custom_call.1} parent=1 // pred_region
      %35 = dma.done [#allocation4], 128
    $region17: #{tpu_custom_call.1} parent=1 // pred_fallthru
      _
    %36 = vsyncpa [#allocation3], 1
    %37 = vsyncpa [#allocation4], 1

</llo_original>
